<compile_context>
chip_gen: v7x
topology: tpu7x:2x2x1
jax: 0.10.0
libtpu: 0.0.40
codegen_flags: <defaults>
</compile_context>

<pallas_src>
import math

import jax
import jax.numpy as jnp
from jax.experimental import pallas as pl
from jax.experimental.pallas import tpu as pltpu

_INV_SQRT2 = 1.0 / math.sqrt(2.0)
_SQRT_2_OVER_PI = math.sqrt(2.0 / math.pi)


def _cdiv(a, b):
    return (a + b - 1) // b


def _round_up(x, m):
    return _cdiv(x, m) * m


def _tpu_vmem_bytes():
    """Per-core VMEM capacity; conservative fallback fits every generation."""
    try:
        return int(pltpu.get_tpu_info().vmem_capacity_bytes)
    except Exception:
        return 64 * 1024 * 1024  # v7x per-TC size; safe on v5e/v6e too


def _pick_ff_tile(d_ff, d_model, itw, budget):
    """Bound the double-buffered W1+W2 slabs (4 * d_model * tf * itw bytes)
    to ~40% of the VMEM budget, keeping tf a multiple of 128 lanes."""
    tf_cap = int(0.4 * budget) // max(1, 4 * d_model * itw)
    tf_cap = max(128, tf_cap)
    if d_ff <= tf_cap:
        return d_ff
    tf = (min(tf_cap, d_ff) // 128) * 128
    while tf >= 128:
        if d_ff % tf == 0:
            return tf
        tf -= 128
    return d_ff  # no 128-multiple divisor: fall back to the full dim


def _pick_inner_chunk(tf):
    """In-kernel sub-tile width for the GELU intermediate (divides tf)."""
    if tf <= 512:
        return tf
    for c in (512, 384, 256, 128):
        if tf % c == 0:
            return c
    return tf


def _pick_row_tile(M, tm_cap):
    """Near-divisor row tile (minimal padding), mildly preferring an even
    number of row blocks (v7x has 2 TensorCores on the 'parallel' M axis)."""
    tm_cap = max(8, (tm_cap // 8) * 8)
    tm_cap = min(tm_cap, _round_up(M, 8))
    nb = _cdiv(M, tm_cap)
    if nb % 2 == 1 and _round_up(_cdiv(M, nb + 1), 8) >= 256:
        nb += 1  # even block count only if tiles stay large (>=256 rows)
    return _round_up(_cdiv(M, nb), 8)


def _make_ffn_kernel(tf, tc, approx_gelu):
    assert tf % tc == 0
    n_chunks = tf // tc

    def kernel(x_ref, w1_ref, b1_ref, w2_ref, b2_ref, o_ref, acc_ref):
        k = pl.program_id(1)

        @pl.when(k == 0)
        def _init():
            acc_ref[...] = jnp.zeros_like(acc_ref)

        x = x_ref[...]
        partial = None
        # Sub-tile the d_ff slab with static (lane-aligned) slices so the live
        # (tm, tc) f32 GELU intermediate stays bounded while the DMA'd slab
        # remains wide. Accumulator is written once per grid step.
        for c in range(n_chunks):
            lo = c * tc
            w1c = w1_ref[:, lo:lo + tc]
            b1c = b1_ref[:, lo:lo + tc]
            w2c = w2_ref[lo:lo + tc, :]

            # h = GELU(x @ W1_chunk + b1_chunk)  -- f32 accumulation on MXU
            h = jnp.dot(x, w1c, preferred_element_type=jnp.float32)
            h = h + b1c.astype(jnp.float32)
            if approx_gelu:
                # tanh approximation: EUP tanh keeps the epilogue off the
                # binding VALU slot on fast-MXU chips (v6e/v7x).
                h = 0.5 * h * (1.0 + jnp.tanh(
                    _SQRT_2_OVER_PI * (h + 0.044715 * h * h * h)))
            else:
                # exact (erf-based) GELU, matching nn.GELU() default
                h = 0.5 * h * (1.0 + jax.lax.erf(h * _INV_SQRT2))

            # TODO(synk): dropout omitted — module evaluated in inference mode
            # (identity); training would need pltpu.prng_seed/prng_random_bits.

            p = jnp.dot(h.astype(w2c.dtype), w2c,
                        preferred_element_type=jnp.float32)
            partial = p if partial is None else partial + p

        acc_ref[...] += partial

        @pl.when(k == pl.num_programs(1) - 1)
        def _fin():
            o_ref[...] = (acc_ref[...]
                          + b2_ref[...].astype(jnp.float32)).astype(o_ref.dtype)

    return kernel


def feed_forward(x, w1, b1, w2, b2, *, tm=None, tf=None, approx_gelu=False,
                 compute_dtype=None):
    """x: [B, S, d_model]; w1: [d_model, d_ff]; b1: [d_ff];
       w2: [d_ff, d_model]; b2: [d_model]."""
    B, S, d_model = x.shape
    d_ff = w1.shape[1]
    M = B * S
    out_dtype = x.dtype

    if compute_dtype is not None:
        # One-time cast in the wrapper (e.g. bf16): halves weight DMA and uses
        # the native MXU fast path; accumulation stays f32 in-kernel.
        x = x.astype(compute_dtype)
        w1 = w1.astype(compute_dtype)
        w2 = w2.astype(compute_dtype)
    # Note: f32 operands use the default TPU dot precision (same as the JAX
    # reference); set compute_dtype=jnp.bfloat16 explicitly for the fast path.

    itx = jnp.dtype(x.dtype).itemsize
    itw = jnp.dtype(w1.dtype).itemsize
    ito = jnp.dtype(out_dtype).itemsize

    # Generation-aware VMEM budget (128 MiB v5e/v6e, 64 MiB per TC on v7x).
    vmem_cap = _tpu_vmem_bytes()
    budget = int(0.85 * vmem_cap)

    if tf is None:
        tf = _pick_ff_tile(d_ff, d_model, itw, budget)
    assert d_ff % tf == 0 and (tf == d_ff or tf % 128 == 0), "bad d_ff tile"
    tc = _pick_inner_chunk(tf)

    # VMEM left for row-scaled buffers after the (double-buffered) weight slabs.
    weight_bytes = 4 * d_model * tf * itw + 4 * tf * itw + 2 * d_model * itw
    per_row = d_model * (2 * itx + 2 * ito + 4 + 4) + tc * (4 + itw)
    rows_budget = max(0, budget - weight_bytes)
    tm_vmem = max(8, rows_budget // per_row)

    if tm is None:
        # Roofline: weight HBM traffic scales as M/tm (W1+W2 re-streamed per
        # row block), so target big tiles (1024 covers all generations' ridge
        # points) and let the per-chip VMEM budget cap it.
        tm = _pick_row_tile(M, min(1024, tm_vmem))
    assert tm % 8 == 0, "row tile must be a multiple of 8 (sublanes)"

    M_pad = _round_up(M, tm)
    x2 = x.reshape(M, d_model)
    if M_pad != M:
        x2 = jnp.pad(x2, ((0, M_pad - M), (0, 0)))
    b1_2d = b1.reshape(1, d_ff)
    b2_2d = b2.reshape(1, d_model)

    grid = (M_pad // tm, d_ff // tf)

    vmem_est = (2 * tm * d_model * itx               # x tile (double-buffered)
                + 4 * d_model * tf * itw             # W1 + W2 slabs
                + 4 * tf * itw + 2 * d_model * itw   # b1, b2
                + 2 * tm * d_model * ito             # out tile
                + 2 * tm * d_model * 4               # f32 accumulator + partial
                + tm * tc * (4 + itw))               # GELU intermediate + cast
    vmem_limit = int(min(budget, max(2 * vmem_est, 32 * 1024 * 1024)))

    flops = 4 * M_pad * d_model * d_ff
    bytes_accessed = (M_pad * d_model * (itx + ito)
                      + (M_pad // tm) * 2 * d_model * d_ff * itw
                      + d_ff * itw + d_model * itw)
    cost = pl.CostEstimate(flops=int(flops),
                           bytes_accessed=int(bytes_accessed),
                           transcendentals=int(M_pad * d_ff))

    kernel = _make_ffn_kernel(tf, tc, approx_gelu)

    out2 = pl.pallas_call(
        kernel,
        out_shape=jax.ShapeDtypeStruct((M_pad, d_model), out_dtype),
        grid_spec=pltpu.PrefetchScalarGridSpec(
            num_scalar_prefetch=0,
            grid=grid,
            in_specs=[
                pl.BlockSpec((tm, d_model), lambda i, k: (i, 0)),   # x (k-invariant)
                pl.BlockSpec((d_model, tf), lambda i, k: (0, k)),   # W1 slab
                pl.BlockSpec((1, tf),       lambda i, k: (0, k)),   # b1 slab
                pl.BlockSpec((tf, d_model), lambda i, k: (k, 0)),   # W2 slab
                pl.BlockSpec((1, d_model),  lambda i, k: (0, 0)),   # b2
                # TODO(synk): b2's constant-index spec could use
                # pipeline_mode=pl.Buffered(1) for a tiny VMEM saving; W1/W2/b1
                # must stay double-buffered (k-dependent) to overlap DMA w/ MXU.
            ],
            out_specs=pl.BlockSpec((tm, d_model), lambda i, k: (i, 0)),
            scratch_shapes=[pltpu.VMEM((tm, d_model), jnp.float32)],
        ),
        compiler_params=pltpu.CompilerParams(
            dimension_semantics=("parallel", "arbitrary"),
            vmem_limit_bytes=vmem_limit,
        ),
        cost_estimate=cost,
    )(x2, w1, b1_2d, w2, b2_2d)

    return out2[:M].reshape(B, S, d_model)


def _reference(x, w1, b1, w2, b2):
    h = jnp.einsum("bsd,df->bsf", x, w1) + b1
    h = 0.5 * h * (1.0 + jax.lax.erf(h / jnp.sqrt(2.0)))
    return jnp.einsum("bsf,fd->bsd", h, w2) + b2


def _make_inputs(key, B, S, d_model, d_ff):
    kx, k1, k2, k3, k4 = jax.random.split(key, 5)
    x = jax.random.normal(kx, (B, S, d_model), dtype=jnp.float32)
    lim1 = 1.0 / math.sqrt(d_model)
    lim2 = 1.0 / math.sqrt(d_ff)
    w1 = jax.random.uniform(k1, (d_model, d_ff), jnp.float32, -lim1, lim1)
    b1 = jax.random.uniform(k2, (d_ff,), jnp.float32, -lim1, lim1)
    w2 = jax.random.uniform(k3, (d_ff, d_model), jnp.float32, -lim2, lim2)
    b2 = jax.random.uniform(k4, (d_model,), jnp.float32, -lim2, lim2)
    return x, w1, b1, w2, b2


if __name__ == "__main__":
    key = jax.random.PRNGKey(0)
    k_a, k_b = jax.random.split(key)

    # Case 1: small shapes consistent with the module (single-tile path).
    B, S, d_model, d_ff = 2, 8, 32, 64
    x, w1, b1, w2, b2 = _make_inputs(k_a, B, S, d_model, d_ff)
    out = feed_forward(x, w1, b1, w2, b2)
    jax.block_until_ready(out)
    ref = _reference(x, w1, b1, w2, b2)
    assert out.shape == (B, S, d_model)
    assert jnp.allclose(out, ref, atol=1e-4, rtol=1e-4), "case1 mismatch"

    # Case 2: exercise multi-step grid (row padding + d_ff reduction tiling
    # + in-kernel sub-chunking of the slab).
    B, S, d_model, d_ff = 2, 7, 32, 256
    x, w1, b1, w2, b2 = _make_inputs(k_b, B, S, d_model, d_ff)
    out = feed_forward(x, w1, b1, w2, b2, tm=8, tf=128)   # grid (2, 2)
    jax.block_until_ready(out)
    ref = _reference(x, w1, b1, w2, b2)
    assert out.shape == (B, S, d_model)
    assert jnp.allclose(out, ref, atol=1e-4, rtol=1e-4), "case2 mismatch"

    print("KERNEL_OK")
</pallas_src>

<mosaic_0001>
module attributes {stable_mosaic.version = 11 : i64} {
  func.func @kernel(%arg0: i32, %arg1: i32, %arg2: memref<16x32xf32, #tpu.memory_space<vmem>>, %arg3: memref<32x64xf32, #tpu.memory_space<vmem>>, %arg4: memref<1x64xf32, #tpu.memory_space<vmem>>, %arg5: memref<64x32xf32, #tpu.memory_space<vmem>>, %arg6: memref<1x32xf32, #tpu.memory_space<vmem>>, %arg7: memref<16x32xf32, #tpu.memory_space<vmem>>, %arg8: memref<16x32xf32, #tpu.memory_space<vmem>>) attributes {dimension_semantics = [#tpu.dimension_semantics<parallel>, #tpu.dimension_semantics<arbitrary>], iteration_bounds = array<i64: 1, 1>, scalar_prefetch = 0 : i64, scratch_operands = 1 : i64, tpu.core_type = #tpu.core_type<tc>, window_params = [{transform_indices = @transform_0, window_bounds = array<i64: 16, 32>}, {transform_indices = @transform_1, window_bounds = array<i64: 32, 64>}, {transform_indices = @transform_2, window_bounds = array<i64: 1, 64>}, {transform_indices = @transform_3, window_bounds = array<i64: 64, 32>}, {pipeline_mode = #tpu.pipeline_mode<synchronous>, transform_indices = @transform_4, window_bounds = array<i64: 1, 32>}, {transform_indices = @transform_5, window_bounds = array<i64: 16, 32>}]} {
    %c0_i32 = arith.constant 0 : i32
    %0 = arith.cmpi eq, %arg1, %c0_i32 : i32
    %1 = arith.extui %0 : i1 to i32
    %c0_i32_0 = arith.constant 0 : i32
    %2 = arith.cmpi ne, %1, %c0_i32_0 : i32
    scf.if %2 {
      %cst_18 = arith.constant 0.000000e+00 : f32
      %25 = vector.broadcast %cst_18 : f32 to vector<16x32xf32>
      %c0_19 = arith.constant 0 : index
      %c0_20 = arith.constant 0 : index
      %26 = vector.load %arg8[%c0_19, %c0_20] : memref<16x32xf32, #tpu.memory_space<vmem>>, vector<16x32xf32>
      tpu.vector_store %arg8[%c0_19, %c0_20], %25 {strides = array<i32>} : memref<16x32xf32, #tpu.memory_space<vmem>>, vector<16x32xf32>,
    } else {
    }
    %c0 = arith.constant 0 : index
    %c0_1 = arith.constant 0 : index
    %3 = vector.load %arg2[%c0, %c0_1] : memref<16x32xf32, #tpu.memory_space<vmem>>, vector<16x32xf32>
    %c0_2 = arith.constant 0 : index
    %c0_3 = arith.constant 0 : index
    %4 = vector.load %arg3[%c0_2, %c0_3] : memref<32x64xf32, #tpu.memory_space<vmem>>, vector<32x64xf32>
    %c0_4 = arith.constant 0 : index
    %c0_5 = arith.constant 0 : index
    %5 = vector.load %arg4[%c0_4, %c0_5] : memref<1x64xf32, #tpu.memory_space<vmem>>, vector<1x64xf32>
    %c0_6 = arith.constant 0 : index
    %c0_7 = arith.constant 0 : index
    %6 = vector.load %arg5[%c0_6, %c0_7] : memref<64x32xf32, #tpu.memory_space<vmem>>, vector<64x32xf32>
    %cst = arith.constant dense<0.000000e+00> : vector<16x64xf32>
    %7 = tpu.matmul %3, %4, %cst {dimension_numbers = #tpu.dot_dimension_numbers<[1], [0], [0], [1], [0, 0, 1, 1], [], []>} : vector<16x32xf32>, vector<32x64xf32>, vector<16x64xf32> -> vector<16x64xf32>
    %8 = vector.broadcast %5 : vector<1x64xf32> to vector<16x64xf32>
    %9 = arith.addf %7, %8 : vector<16x64xf32>
    %cst_8 = arith.constant 5.000000e-01 : f32
    %10 = vector.broadcast %cst_8 : f32 to vector<16x64xf32>
    %11 = arith.mulf %10, %9 : vector<16x64xf32>
    %cst_9 = arith.constant 0.707106769 : f32
    %12 = vector.broadcast %cst_9 : f32 to vector<16x64xf32>
    %13 = arith.mulf %9, %12 : vector<16x64xf32>
    %14 = math.erf %13 : vector<16x64xf32>
    %cst_10 = arith.constant 1.000000e+00 : f32
    %15 = vector.broadcast %cst_10 : f32 to vector<16x64xf32>
    %16 = arith.addf %15, %14 : vector<16x64xf32>
    %17 = arith.mulf %11, %16 : vector<16x64xf32>
    %cst_11 = arith.constant dense<0.000000e+00> : vector<16x32xf32>
    %18 = tpu.matmul %17, %6, %cst_11 {dimension_numbers = #tpu.dot_dimension_numbers<[1], [0], [0], [1], [0, 0, 1, 1], [], []>} : vector<16x64xf32>, vector<64x32xf32>, vector<16x32xf32> -> vector<16x32xf32>
    %c0_12 = arith.constant 0 : index
    %c0_13 = arith.constant 0 : index
    %19 = vector.load %arg8[%c0_12, %c0_13] : memref<16x32xf32, #tpu.memory_space<vmem>>, vector<16x32xf32>
    %20 = arith.addf %19, %18 : vector<16x32xf32>
    %c0_14 = arith.constant 0 : index
    %c0_15 = arith.constant 0 : index
    %21 = vector.load %arg8[%c0_14, %c0_15] : memref<16x32xf32, #tpu.memory_space<vmem>>, vector<16x32xf32>
    tpu.vector_store %arg8[%c0_14, %c0_15], %20 {strides = array<i32>} : memref<16x32xf32, #tpu.memory_space<vmem>>, vector<16x32xf32>,
    %c0_i32_16 = arith.constant 0 : i32
    %22 = arith.cmpi eq, %arg1, %c0_i32_16 : i32
    %23 = arith.extui %22 : i1 to i32
    %c0_i32_17 = arith.constant 0 : i32
    %24 = arith.cmpi ne, %23, %c0_i32_17 : i32
    scf.if %24 {
      %c0_18 = arith.constant 0 : index
      %c0_19 = arith.constant 0 : index
      %25 = vector.load %arg8[%c0_18, %c0_19] : memref<16x32xf32, #tpu.memory_space<vmem>>, vector<16x32xf32>
      %c0_20 = arith.constant 0 : index
      %c0_21 = arith.constant 0 : index
      %26 = vector.load %arg6[%c0_20, %c0_21] : memref<1x32xf32, #tpu.memory_space<vmem>>, vector<1x32xf32>
      %27 = vector.broadcast %26 : vector<1x32xf32> to vector<16x32xf32>
      %28 = arith.addf %25, %27 : vector<16x32xf32>
      %c0_22 = arith.constant 0 : index
      %c0_23 = arith.constant 0 : index
      %29 = vector.load %arg7[%c0_22, %c0_23] : memref<16x32xf32, #tpu.memory_space<vmem>>, vector<16x32xf32>
      tpu.vector_store %arg7[%c0_22, %c0_23], %28 {strides = array<i32>} : memref<16x32xf32, #tpu.memory_space<vmem>>, vector<16x32xf32>,
    } else {
    }
    return
  }
  func.func @transform_0(%arg0: i32, %arg1: i32) -> (i32, i32) {
    %c0_i32 = arith.constant 0 : i32
    %c0_i32_0 = arith.constant 0 : i32
    return %arg0, %c0_i32 : i32, i32
  }
  func.func @transform_1(%arg0: i32, %arg1: i32) -> (i32, i32) {
    %c0_i32 = arith.constant 0 : i32
    %c0_i32_0 = arith.constant 0 : i32
    return %c0_i32, %arg1 : i32, i32
  }
  func.func @transform_2(%arg0: i32, %arg1: i32) -> (i32, i32) {
    %c0_i32 = arith.constant 0 : i32
    %c0_i32_0 = arith.constant 0 : i32
    return %c0_i32, %arg1 : i32, i32
  }
  func.func @transform_3(%arg0: i32, %arg1: i32) -> (i32, i32) {
    %c0_i32 = arith.constant 0 : i32
    %c0_i32_0 = arith.constant 0 : i32
    return %arg1, %c0_i32 : i32, i32
  }
  func.func @transform_4(%arg0: i32, %arg1: i32) -> (i32, i32) {
    %c0_i32 = arith.constant 0 : i32
    %c0_i32_0 = arith.constant 0 : i32
    %c0_i32_1 = arith.constant 0 : i32
    return %c0_i32, %c0_i32_0 : i32, i32
  }
  func.func @transform_5(%arg0: i32, %arg1: i32) -> (i32, i32) {
    %c0_i32 = arith.constant 0 : i32
    %c0_i32_0 = arith.constant 0 : i32
    return %arg0, %c0_i32 : i32, i32
  }
}

</mosaic_0001>

<llo_original>
// kernel: tpu_custom_call.1
$region0: #{tpu_custom_call.1}
  #allocation0 [shape = 'u32[]', space=smem, size = 0x4, offset = 0x4, fixed_abs, tag = 'smem constant byte address 0x4 - core index']
  #allocation1 [shape = 'u32[144,128]{1,0:T(1,128)}', space=vmem, size = 0x12000, scoped, tag = 'internal scratch']
  #allocation2 [shape = 'f32[16,32]{1,0:T(8,128)}', space=vmem, size = 0x2000, scoped, tag = 'scratch operand']
  %s0 = inlined_call_operand.vmem [shape: f32[16,32], index: 0, kind: input, shape index: {}]
  %s1 = inlined_call_operand.vmem [shape: f32[32,64], index: 1, kind: input, shape index: {}]
  %s2 = inlined_call_operand.vmem [shape: f32[1,64], index: 2, kind: input, shape index: {}]
  %s3 = inlined_call_operand.vmem [shape: f32[64,32], index: 3, kind: input, shape index: {}]
  %s4 = inlined_call_operand.vmem [shape: f32[1,32], index: 4, kind: input, shape index: {}]
  %s5 = inlined_call_operand.hbm [shape: f32[16,32], index: 5, kind: output, shape index: {}]
  %s6 = sld [smem:[#allocation0]]
  $region38: #{tpu_custom_call.1} parent=0
    _
  %s8 = ssub.s32 1, %s6
  %s9 = scalar_select 0, %s8, %s6
  $region1: #{tpu_custom_call.1} parent=0
    #allocation3 [shape = 'u8[8192]{0}', space=vmem, size = 0x2000, scoped, tag = 'output window, operand 0, single buffered']
    #allocation4 [shape = 's32[1]{0}', space=sflag, size = 0x4, scoped, tag = 'scoped memory for tpu_custom_call.1']
    %10 = vsyncpa [#allocation4], 0
    // Predicated region
    $region2: #{tpu_custom_call.1} parent=1 // pred_check
      _
    $region3: #{tpu_custom_call.1} parent=1 // pred_check_branch
      %12 = sbr.rel (0) target = $region5
    $region4: #{tpu_custom_call.1} parent=1 // pred_region
      _
    $region5: #{tpu_custom_call.1} parent=1 // pred_fallthru
      _
    // Predicated region
    $region6: #{tpu_custom_call.1} parent=1 // pred_check
      _
    $region7: #{tpu_custom_call.1} parent=1 // pred_check_branch
      %14 = sbr.rel (0) target = $region9
    $region8: #{tpu_custom_call.1} parent=1 // pred_region
      _
    $region9: #{tpu_custom_call.1} parent=1 // pred_fallthru
      _
    // Predicated region
    $region10: #{tpu_custom_call.1} parent=1 // pred_check
      _
    $region11: #{tpu_custom_call.1} parent=1 // pred_check_branch
      %16 = sbr.rel (0) target = $region13
    $region12: #{tpu_custom_call.1} parent=1 // pred_region
      _
    $region13: #{tpu_custom_call.1} parent=1 // pred_fallthru
      _
    // Predicated region
    $region14: #{tpu_custom_call.1} parent=1 // pred_check
      _
    $region15: #{tpu_custom_call.1} parent=1 // pred_check_branch
      %18 = sbr.rel (0) target = $region17
    $region16: #{tpu_custom_call.1} parent=1 // pred_region
      _
    $region17: #{tpu_custom_call.1} parent=1 // pred_fallthru
      _
    // Predicated region
    $region18: #{tpu_custom_call.1} parent=1 // pred_check
      _
    $region19: #{tpu_custom_call.1} parent=1 // pred_check_branch
      %20 = sbr.rel (0) target = $region21
    $region20: #{tpu_custom_call.1} parent=1 // pred_region
      _
    $region21: #{tpu_custom_call.1} parent=1 // pred_fallthru
      _
    %p21 = scmp.eq.s32.totalorder 0, 0
    // Predicated region
    $region22: #{tpu_custom_call.1} parent=1 // pred_check
      %p22 = pneg %p21
    $region23: #{tpu_custom_call.1} parent=1 // pred_check_branch
      %24 = sbr.rel (%p22) target = $region25
    $region24: #{tpu_custom_call.1} parent=1 // pred_region
      %vm25 = vcmask 261120
      %26 = vst.msk [vmem:[#allocation2] sm:$0xff] %vm25, 0.0
      %27 = vst.msk [vmem:[#allocation2 + $0x8] sm:$0xff] %vm25, 0.0
    $region25: #{tpu_custom_call.1} parent=1 // pred_fallthru
      _
    %v28 = vld [vmem:[%s0] sm:$0xff]
    %v29 = vld [vmem:[%s0 + $0x8] sm:$0xff]
    %v30 = vld [vmem:[%s1] sm:$0xff]
    %v31 = vld [vmem:[%s1 + $0x8] sm:$0xff]
    %v32 = vld [vmem:[%s1 + $0x10] sm:$0xff]
    %v33 = vld [vmem:[%s1 + $0x18] sm:$0xff]
    %v34 = vld [vmem:[%s2] sm:$0x1]
    %v35 = vld [vmem:[%s3] sm:$0xff]
    %v36 = vld [vmem:[%s3 + $0x8] sm:$0xff]
    %v37 = vld [vmem:[%s3 + $0x10] sm:$0xff]
    %v38 = vld [vmem:[%s3 + $0x18] sm:$0xff]
    %v39 = vld [vmem:[%s3 + $0x20] sm:$0xff]
    %v40 = vld [vmem:[%s3 + $0x28] sm:$0xff]
    %v41 = vld [vmem:[%s3 + $0x30] sm:$0xff]
    %v42 = vld [vmem:[%s3 + $0x38] sm:$0xff]
    %v44 = vlaneseq
    %v45 = vshrl.u32 %v44, 7
    %v46 = vsub.s32 0, %v45
    %v47 = vrot.slane %v34, %v46
    %vm49 = vcmask 261120
    %v51 = vsel %vm49, %v28, 0
    %v54 = vsel %vm49, %v29, 0
    %56 = vmatprep.subr.mxu0 0.0
    %57 = vmatpush1.msra.mxu0 %v30
    %58 = vmatprep.subr.mxu0 0.0
    %59 = vmatpush1.msra.mxu0 %v31
    %60 = vmatprep.subr.mxu0 0.0
    %61 = vmatpush1.msra.mxu0 %v32
    %62 = vmatprep.subr.mxu0 0.0
    %63 = vmatpush1.msra.mxu0 %v33
    %64 = vmatprep.subr.mxu0 0.0
    %65 = vmatpush1.msra.mxu0 0.0
    %66 = vmatprep.subr.mxu0 0.0
    %67 = vmatpush1.msra.mxu0 0.0
    %68 = vmatprep.subr.mxu0 0.0
    %69 = vmatpush1.msra.mxu0 0.0
    %70 = vmatprep.subr.mxu0 0.0
    %71 = vmatpush1.msra.mxu0 0.0
    %72 = vmatprep.subr.mxu0 0.0
    %73 = vmatpush1.msra.mxu0 0.0
    %74 = vmatprep.subr.mxu0 0.0
    %75 = vmatpush1.msra.mxu0 0.0
    %76 = vmatprep.subr.mxu0 0.0
    %77 = vmatpush1.msra.mxu0 0.0
    %78 = vmatprep.subr.mxu0 0.0
    %79 = vmatpush1.msra.mxu0 0.0
    %80 = vmatprep.subr.mxu0 0.0
    %81 = vmatpush1.msra.mxu0 0.0
    %82 = vmatprep.subr.mxu0 0.0
    %83 = vmatpush1.msra.mxu0 0.0
    %84 = vmatprep.subr.mxu0 0.0
    %85 = vmatpush1.msra.mxu0 0.0
    %86 = vmatprep.subr.mxu0 0.0
    %87 = vmatpush1.msra.mxu0 0.0
    %88 = vmatprep.subr.mxu0 0.0
    %89 = vmatpush1.msra.mxu0 0.0
    %90 = vmatprep.subr.mxu0 0.0
    %91 = vmatpush1.msra.mxu0 0.0
    %92 = vmatprep.subr.mxu0 0.0
    %93 = vmatpush1.msra.mxu0 0.0
    %94 = vmatprep.subr.mxu0 0.0
    %95 = vmatpush1.msra.mxu0 0.0
    %96 = vmatprep.subr.mxu0 0.0
    %97 = vmatpush1.msra.mxu0 0.0
    %98 = vmatprep.subr.mxu0 0.0
    %99 = vmatpush1.msra.mxu0 0.0
    %100 = vmatprep.subr.mxu0 0.0
    %101 = vmatpush1.msra.mxu0 0.0
    %102 = vmatprep.subr.mxu0 0.0
    %103 = vmatpush1.msra.mxu0 0.0
    %104 = vmatprep.subr.mxu0 0.0
    %105 = vmatpush1.msra.mxu0 0.0
    %106 = vmatprep.subr.mxu0 0.0
    %107 = vmatpush1.msra.mxu0 0.0
    %108 = vmatprep.subr.mxu0 0.0
    %109 = vmatpush1.msra.mxu0 0.0
    %110 = vmatprep.subr.mxu0 0.0
    %111 = vmatpush1.msra.mxu0 0.0
    %112 = vmatprep.subr.mxu0 0.0
    %113 = vmatpush1.msra.mxu0 0.0
    %114 = vmatprep.subr.mxu0 0.0
    %115 = vmatpush1.msra.mxu0 0.0
    %116 = vmatprep.subr.mxu0 0.0
    %117 = vmatpush1.msra.mxu0 0.0
    %118 = vmatprep.subr.mxu0 0.0
    %119 = vmatpush1.msra.mxu0 0.0
    %120 = vmatprep.mubr.f32.mxu0 0.0
    %121 = vmatmul.mubr.f32.gmra.mrb[0].mxu0 %v51
    %v122 = vpop.f32.mrb[0].mxu0
    %v123 = vadd.f32 %v47, %v122
    %v124 = vpop.f32.mrb[0].mxu0
    %125 = vmatprep.mubr.f32.mxu0 0.0
    %126 = vmatmul.mubr.f32.gmra.mrb[0].mxu0 %v54
    %v127 = vpop.f32.mrb[0].mxu0
    %v128 = vadd.f32 %v47, %v127
    %v129 = vpop.f32.mrb[0].mxu0
    %130 = vdwg.mxu0
    %v131 = vmul.f32 %v123, 0.5
    %v132 = vmul.f32 %v128, 0.5
    %v133 = vmul.f32 %v123, 0.70710677
    %v134 = vmul.f32 %v128, 0.70710677
    %v135 = verf.f32.pop %v133
    %v136 = verf.f32.pop %v134
    %v137 = vadd.f32 %v135, 1.0
    %v138 = vadd.f32 %v136, 1.0
    %v139 = vmul.f32 %v131, %v137
    %v140 = vmul.f32 %v132, %v138
    %vm141 = vcmask 523264
    %v143 = vsel %vm141, %v139, 0
    %v146 = vsel %vm141, %v140, 0
    %148 = vmatprep.subr.mxu0 0.0
    %149 = vmatpush1.msra.mxu0 %v35
    %150 = vmatprep.subr.mxu0 0.0
    %151 = vmatpush1.msra.mxu0 %v36
    %152 = vmatprep.subr.mxu0 0.0
    %153 = vmatpush1.msra.mxu0 %v37
    %154 = vmatprep.subr.mxu0 0.0
    %155 = vmatpush1.msra.mxu0 %v38
    %156 = vmatprep.subr.mxu0 0.0
    %157 = vmatpush1.msra.mxu0 %v39
    %158 = vmatprep.subr.mxu0 0.0
    %159 = vmatpush1.msra.mxu0 %v40
    %160 = vmatprep.subr.mxu0 0.0
    %161 = vmatpush1.msra.mxu0 %v41
    %162 = vmatprep.subr.mxu0 0.0
    %163 = vmatpush1.msra.mxu0 %v42
    %164 = vmatprep.subr.mxu0 0.0
    %165 = vmatpush1.msra.mxu0 0.0
    %166 = vmatprep.subr.mxu0 0.0
    %167 = vmatpush1.msra.mxu0 0.0
    %168 = vmatprep.subr.mxu0 0.0
    %169 = vmatpush1.msra.mxu0 0.0
    %170 = vmatprep.subr.mxu0 0.0
    %171 = vmatpush1.msra.mxu0 0.0
    %172 = vmatprep.subr.mxu0 0.0
    %173 = vmatpush1.msra.mxu0 0.0
    %174 = vmatprep.subr.mxu0 0.0
    %175 = vmatpush1.msra.mxu0 0.0
    %176 = vmatprep.subr.mxu0 0.0
    %177 = vmatpush1.msra.mxu0 0.0
    %178 = vmatprep.subr.mxu0 0.0
    %179 = vmatpush1.msra.mxu0 0.0
    %180 = vmatprep.subr.mxu0 0.0
    %181 = vmatpush1.msra.mxu0 0.0
    %182 = vmatprep.subr.mxu0 0.0
    %183 = vmatpush1.msra.mxu0 0.0
    %184 = vmatprep.subr.mxu0 0.0
    %185 = vmatpush1.msra.mxu0 0.0
    %186 = vmatprep.subr.mxu0 0.0
    %187 = vmatpush1.msra.mxu0 0.0
    %188 = vmatprep.subr.mxu0 0.0
    %189 = vmatpush1.msra.mxu0 0.0
    %190 = vmatprep.subr.mxu0 0.0
    %191 = vmatpush1.msra.mxu0 0.0
    %192 = vmatprep.subr.mxu0 0.0
    %193 = vmatpush1.msra.mxu0 0.0
    %194 = vmatprep.subr.mxu0 0.0
    %195 = vmatpush1.msra.mxu0 0.0
    %196 = vmatprep.subr.mxu0 0.0
    %197 = vmatpush1.msra.mxu0 0.0
    %198 = vmatprep.subr.mxu0 0.0
    %199 = vmatpush1.msra.mxu0 0.0
    %200 = vmatprep.subr.mxu0 0.0
    %201 = vmatpush1.msra.mxu0 0.0
    %202 = vmatprep.subr.mxu0 0.0
    %203 = vmatpush1.msra.mxu0 0.0
    %204 = vmatprep.subr.mxu0 0.0
    %205 = vmatpush1.msra.mxu0 0.0
    %206 = vmatprep.subr.mxu0 0.0
    %207 = vmatpush1.msra.mxu0 0.0
    %208 = vmatprep.subr.mxu0 0.0
    %209 = vmatpush1.msra.mxu0 0.0
    %210 = vmatprep.subr.mxu0 0.0
    %211 = vmatpush1.msra.mxu0 0.0
    %212 = vmatprep.mubr.f32.mxu0 0.0
    %213 = vmatmul.mubr.f32.gmra.mrb[0].mxu0 %v143
    %v214 = vpop.f32.mrb[0].mxu0
    %v215 = vadd.f32 0.0, %v214
    %v216 = vpop.f32.mrb[0].mxu0
    %217 = vmatprep.mubr.f32.mxu0 0.0
    %218 = vmatmul.mubr.f32.gmra.mrb[0].mxu0 %v146
    %v219 = vpop.f32.mrb[0].mxu0
    %v220 = vadd.f32 0.0, %v219
    %v221 = vpop.f32.mrb[0].mxu0
    %222 = vdwg.mxu0
    %v223 = vld [vmem:[#allocation2] sm:$0xff]
    %v224 = vld [vmem:[#allocation2 + $0x8] sm:$0xff]
    %v225 = vadd.f32 %v223, %v215
    %v226 = vadd.f32 %v224, %v220
    %227 = vst.msk [vmem:[#allocation2] sm:$0xff] %vm49, %v225
    %228 = vst.msk [vmem:[#allocation2 + $0x8] sm:$0xff] %vm49, %v226
    // Predicated region
    $region26: #{tpu_custom_call.1} parent=1 // pred_check
      %p229 = pneg %p21
    $region27: #{tpu_custom_call.1} parent=1 // pred_check_branch
      %231 = sbr.rel (%p229) target = $region29
    $region28: #{tpu_custom_call.1} parent=1 // pred_region
      %v232 = vld [vmem:[#allocation2] sm:$0xff]
      %v233 = vld [vmem:[#allocation2 + $0x8] sm:$0xff]
      %v234 = vld [vmem:[%s4] sm:$0x1]
      %v236 = vlaneseq
      %v237 = vshrl.u32 %v236, 7
      %v238 = vsub.s32 0, %v237
      %v239 = vrot.slane %v234, %v238
      %v241 = vadd.f32 %v232, %v239
      %v242 = vadd.f32 %v233, %v239
      %243 = vst.msk [vmem:[#allocation3] sm:$0xff] %vm49, %v241
      %244 = vst.msk [vmem:[#allocation3 + $0x8] sm:$0xff] %vm49, %v242
    $region29: #{tpu_custom_call.1} parent=1 // pred_fallthru
      _
    // Predicated region
    $region30: #{tpu_custom_call.1} parent=1 // pred_check
      _
    $region31: #{tpu_custom_call.1} parent=1 // pred_check_branch
      %246 = sbr.rel (0) target = $region33
    $region32: #{tpu_custom_call.1} parent=1 // pred_region
      %s248 = ssub.s32 256, 256
      %249 = vsyncadd [#allocation4], %s248
      %s250 = sshll.u32 [#allocation3], 4
      %s251 = int_to_ptr.vmem [resolvable:$true] %s250
      %256 = dma.vmem_to_hbm [thread:$0]  %s251, 256, %s5, [#allocation4], 128, 128, 8
    $region33: #{tpu_custom_call.1} parent=1 // pred_fallthru
      _
    // Predicated region
    $region34: #{tpu_custom_call.1} parent=1 // pred_check
      _
    $region35: #{tpu_custom_call.1} parent=1 // pred_check_branch
      %258 = sbr.rel (0) target = $region37
    $region36: #{tpu_custom_call.1} parent=1 // pred_region
      %259 = dma.done [#allocation4], 256
    $region37: #{tpu_custom_call.1} parent=1 // pred_fallthru
      _
    %260 = vsyncpa [#allocation4], 1

</llo_original>
